<compile_context>
chip_gen: v5e
topology: v5e:2x2
jax: 0.10.0
libtpu: 0.0.40
codegen_flags: <defaults>
</compile_context>

<pallas_src>
import jax
import jax.numpy as jnp
from jax.experimental import pallas as pl
from jax.experimental.pallas import tpu as pltpu


def _mean_linear_relu6_kernel(x_ref, s_ref, o_ref):
    # x_ref: (N, D_in) f32, s_ref: (1, D_out) f32 (pre-scaled weight sums), o_ref: (N, D_out) f32
    x = x_ref[...]
    s = s_ref[...]                                   # (1, D_out), already scaled by 1/D_in

    # Row sum of x (lane reduction, keepdims). The 1/D_in factor lives in s.
    m = jnp.sum(x, axis=-1, keepdims=True)           # (N, 1)

    # Outer product on the VPU: y[n, o] = mean(x[n, :]) * sum_k W[o, k]
    y = m * s                                        # (N, D_out)

    # l3 = y + 3 ; l4 = clamp_min(., 0) ; l5 = clamp_max(., 6)  -> relu6(y + 3)
    y = jnp.minimum(jnp.maximum(y + 3.0, 0.0), 6.0)

    o_ref[...] = y.astype(o_ref.dtype)


def mean_linear_relu6(x, w):
    """x: (N, D_in) f32; w: (D_out, D_in) f32 (PyTorch nn.Linear convention)."""
    N, D_in = x.shape
    D_out, D_in_w = w.shape
    assert D_in == D_in_w

    # Precompute the pre-scaled per-output weight sum as a lane-resident row vector.
    # For a jit-constant weight this folds to a compile-time constant.
    s = (jnp.sum(w, axis=1) * (1.0 / D_in)).reshape(1, D_out)    # (1, D_out)

    cost = pl.CostEstimate(
        flops=N * D_in + 4 * N * D_out,
        transcendentals=0,
        bytes_accessed=(N * D_in + D_out + N * D_out) * 4,
    )

    return pl.pallas_call(
        _mean_linear_relu6_kernel,
        out_shape=jax.ShapeDtypeStruct((N, D_out), x.dtype),
        in_specs=[
            pl.BlockSpec((N, D_in), lambda: (0, 0),
                         memory_space=pltpu.MemorySpace.VMEM),
            pl.BlockSpec((1, D_out), lambda: (0, 0),
                         memory_space=pltpu.MemorySpace.VMEM),
        ],
        out_specs=pl.BlockSpec((N, D_out), lambda: (0, 0),
                               memory_space=pltpu.MemorySpace.VMEM),
        compiler_params=pltpu.CompilerParams(
            allow_input_fusion=[True, True],
        ),
        cost_estimate=cost,
    )(x, s)


def reference(x, w):
    m = jnp.mean(x, axis=-1, keepdims=True)
    y = jnp.broadcast_to(m, x.shape) @ w.T
    return jnp.clip(y + 3.0, 0.0, 6.0)


if __name__ == "__main__":
    key = jax.random.PRNGKey(0)
    kx, kw = jax.random.split(key)

    # Module-implied shapes: x1 = (32, 10); Linear(10, 20, bias=False) -> W (20, 10)
    x1 = jax.random.normal(kx, (32, 10), dtype=jnp.float32)

    # Deterministic init mimicking torch.nn.Linear default: U(-1/sqrt(fan_in), 1/sqrt(fan_in))
    bound = 1.0 / jnp.sqrt(10.0)
    w = jax.random.uniform(kw, (20, 10), dtype=jnp.float32, minval=-bound, maxval=bound)

    out = mean_linear_relu6(x1, w)
    out = jax.block_until_ready(out)

    ref = reference(x1, w)
    assert out.shape == (32, 20)
    assert jnp.allclose(out, ref, atol=1e-5, rtol=1e-5)

    print("KERNEL_OK")
</pallas_src>

<mosaic_0001>
module attributes {stable_mosaic.version = 11 : i64} {
  func.func @_mean_linear_relu6_kernel(%arg0: memref<32x10xf32, #tpu.memory_space<vmem>>, %arg1: memref<1x20xf32, #tpu.memory_space<vmem>>, %arg2: memref<32x20xf32, #tpu.memory_space<vmem>>) attributes {dimension_semantics = [], scalar_prefetch = 0 : i64, scratch_operands = 0 : i64, tpu.core_type = #tpu.core_type<tc>} {
    %c0 = arith.constant 0 : index
    %c0_0 = arith.constant 0 : index
    %0 = vector.load %arg0[%c0, %c0_0] : memref<32x10xf32, #tpu.memory_space<vmem>>, vector<32x10xf32>
    %c0_1 = arith.constant 0 : index
    %c0_2 = arith.constant 0 : index
    %1 = vector.load %arg1[%c0_1, %c0_2] : memref<1x20xf32, #tpu.memory_space<vmem>>, vector<1x20xf32>
    %cst = arith.constant dense<0.000000e+00> : vector<32xf32>
    %2 = vector.multi_reduction <add>, %0, %cst [1] : vector<32x10xf32> to vector<32xf32>
    %3 = vector.shape_cast %2 : vector<32xf32> to vector<32x1xf32>
    %4 = vector.broadcast %3 : vector<32x1xf32> to vector<32x20xf32>
    %5 = vector.broadcast %1 : vector<1x20xf32> to vector<32x20xf32>
    %6 = arith.mulf %4, %5 : vector<32x20xf32>
    %cst_3 = arith.constant 3.000000e+00 : f32
    %7 = vector.broadcast %cst_3 : f32 to vector<32x20xf32>
    %8 = arith.addf %6, %7 : vector<32x20xf32>
    %cst_4 = arith.constant 0.000000e+00 : f32
    %9 = vector.broadcast %cst_4 : f32 to vector<32x20xf32>
    %10 = arith.maximumf %8, %9 : vector<32x20xf32>
    %cst_5 = arith.constant 6.000000e+00 : f32
    %11 = vector.broadcast %cst_5 : f32 to vector<32x20xf32>
    %12 = arith.minimumf %10, %11 : vector<32x20xf32>
    %c0_6 = arith.constant 0 : index
    %c0_7 = arith.constant 0 : index
    %13 = vector.load %arg2[%c0_6, %c0_7] : memref<32x20xf32, #tpu.memory_space<vmem>>, vector<32x20xf32>
    tpu.vector_store %arg2[%c0_6, %c0_7], %12 {strides = array<i32>} : memref<32x20xf32, #tpu.memory_space<vmem>>, vector<32x20xf32>,
    return
  }
}

</mosaic_0001>

<llo_original>
// kernel: tpu_custom_call.1
$region0: #{tpu_custom_call.1}
  #allocation0 [shape = 'u32[]', space=smem, size = 0x4, offset = 0x4, fixed_abs, tag = 'smem constant byte address 0x4 - core index']
  #allocation1 [shape = 'u32[72,128]{1,0:T(1,128)}', space=vmem, size = 0x9000, scoped, tag = 'internal scratch']
  %s0 = inlined_call_operand.vmem [shape: f32[32,10], index: 0, kind: input, shape index: {}]
  %s1 = inlined_call_operand.vmem [shape: f32[1,20], index: 1, kind: input, shape index: {}]
  %s2 = inlined_call_operand.vmem [shape: f32[32,20], index: 2, kind: output, shape index: {}]
  %s3 = sld [smem:[#allocation0]]
  $region18: #{tpu_custom_call.1} parent=0
    _
  %s5 = ssub.s32 1, %s3
  %s6 = scalar_select 0, %s5, %s3
  // Predicated region
  $region2: #{tpu_custom_call.1} parent=0 // pred_check
    _
  $region3: #{tpu_custom_call.1} parent=0 // pred_check_branch
    %8 = sbr.rel (0) target = $region5
  $region4: #{tpu_custom_call.1} parent=0 // pred_region
    _
  $region5: #{tpu_custom_call.1} parent=0 // pred_fallthru
    _
  // Predicated region
  $region6: #{tpu_custom_call.1} parent=0 // pred_check
    _
  $region7: #{tpu_custom_call.1} parent=0 // pred_check_branch
    %10 = sbr.rel (0) target = $region9
  $region8: #{tpu_custom_call.1} parent=0 // pred_region
    _
  $region9: #{tpu_custom_call.1} parent=0 // pred_fallthru
    _
  %v11 = vld [vmem:[%s0] sm:$0xff]
  %v12 = vld [vmem:[%s0 + $0x8] sm:$0xff]
  %v13 = vld [vmem:[%s0 + $0x10] sm:$0xff]
  %v14 = vld [vmem:[%s0 + $0x18] sm:$0xff]
  %v15 = vld [vmem:[%s1] sm:$0x1]
  %vm16 = vcmask 80896
  %v17 = vsel %vm16, %v11, 0.0
  %18 = vadd.xlane.f32.xlu0 %v17
  %v19 = vpop.xlane.xlu0 %18
  %v20 = vsel %vm16, %v12, 0.0
  %21 = vadd.xlane.f32.xlu0 %v20
  %v22 = vpop.xlane.xlu0 %21
  %v23 = vsel %vm16, %v13, 0.0
  %24 = vadd.xlane.f32.xlu0 %v23
  %v25 = vpop.xlane.xlu0 %24
  %v26 = vsel %vm16, %v14, 0.0
  %27 = vadd.xlane.f32.xlu0 %v26
  %v28 = vpop.xlane.xlu0 %27
  %v30 = vperm.slane %v15, 0
  %v32 = vmul.f32 %v19, %v30
  %v33 = vmul.f32 %v22, %v30
  %v34 = vmul.f32 %v25, %v30
  %v35 = vmul.f32 %v28, %v30
  %v36 = vadd.f32 %v32, 3.0
  %v37 = vadd.f32 %v33, 3.0
  %v38 = vadd.f32 %v34, 3.0
  %v39 = vadd.f32 %v35, 3.0
  %v40 = vmax.f32 %v36, 0.0
  %v41 = vmax.f32 %v37, 0.0
  %v42 = vmax.f32 %v38, 0.0
  %v43 = vmax.f32 %v39, 0.0
  %v44 = vmin.f32 %v40, 6.0
  %v45 = vmin.f32 %v41, 6.0
  %v46 = vmin.f32 %v42, 6.0
  %v47 = vmin.f32 %v43, 6.0
  %vm48 = vcmask 162816
  %49 = vst.msk [vmem:[%s2] sm:$0xff] %vm48, %v44
  %50 = vst.msk [vmem:[%s2 + $0x8] sm:$0xff] %vm48, %v45
  %51 = vst.msk [vmem:[%s2 + $0x10] sm:$0xff] %vm48, %v46
  %52 = vst.msk [vmem:[%s2 + $0x18] sm:$0xff] %vm48, %v47
  // Predicated region
  $region10: #{tpu_custom_call.1} parent=0 // pred_check
    _
  $region11: #{tpu_custom_call.1} parent=0 // pred_check_branch
    %54 = sbr.rel (0) target = $region13
  $region12: #{tpu_custom_call.1} parent=0 // pred_region
    _
  $region13: #{tpu_custom_call.1} parent=0 // pred_fallthru
    _
  // Predicated region
  $region14: #{tpu_custom_call.1} parent=0 // pred_check
    _
  $region15: #{tpu_custom_call.1} parent=0 // pred_check_branch
    %56 = sbr.rel (0) target = $region17
  $region16: #{tpu_custom_call.1} parent=0 // pred_region
    _
  $region17: #{tpu_custom_call.1} parent=0 // pred_fallthru
    _

</llo_original>
